<compile_context>
chip_gen: v5e
topology: v5e:2x2
jax: 0.10.0
libtpu: 0.0.40
codegen_flags: <defaults>
</compile_context>

<pallas_src>
import functools

import jax
import jax.numpy as jnp
from jax.experimental import pallas as pl
from jax.experimental.pallas import tpu as pltpu


_LANE_CANDIDATES = (4096, 2048, 1024, 512, 256, 128)


def _copy_kernel(x_ref, o_ref):
    # Identity copy of the current VMEM tile (load/store slots only).
    o_ref[...] = x_ref[...]


def _resolve_shape(numel, out_shape):
    shape = list(out_shape)
    if shape.count(-1) > 1:
        raise ValueError("only one dimension can be -1")
    if -1 in shape:
        known = 1
        for s in shape:
            if s != -1:
                known *= s
        if known == 0 or numel % known != 0:
            raise ValueError(f"cannot view {numel} elements as {tuple(out_shape)}")
        shape[shape.index(-1)] = numel // known
    total = 1
    for s in shape:
        total *= s
    if total != numel:
        raise ValueError(f"cannot view {numel} elements as {tuple(out_shape)}")
    return tuple(shape)


def _sublane_min(dtype):
    # Packed sublanes per vreg: 8 for 4-byte, 16 for 2-byte, 32 for 1-byte.
    return {4: 8, 2: 16, 1: 32}.get(jnp.dtype(dtype).itemsize, 8)


@functools.lru_cache(maxsize=None)
def _vmem_budget():
    """Generation-aware (vmem_limit_bytes, per-block byte cap)."""
    phys = 64 * 1024 * 1024  # conservative default (v7x per-core physical VMEM)
    try:
        phys = int(pltpu.get_tpu_info().vmem_capacity_bytes)
    except Exception:
        pass
    # Request ~half of physical VMEM as scoped VMEM (64 MiB on v5e/v6e's
    # 128 MiB, 32 MiB on v7x's 64 MiB).  Auto-pipelining double-buffers both
    # the input and the output block (~4x block bytes), so cap one block at
    # ~1/5 of the request to leave headroom.
    vmem_limit = min(phys // 2, 64 * 1024 * 1024)
    return vmem_limit, vmem_limit // 5


def _pick_tile_rows(rows, row_bytes, sub, block_cap):
    """Rows per block: multiple of `sub` (or == rows), and <= block_cap bytes.

    Also caps the tile at ~half the rows so the 1-D grid has >= 2 steps
    whenever the rows dim can legally be split -- with
    dimension_semantics=("parallel",) both v7x TensorCores then stream HBM
    concurrently.  Returns None if no legal tile fits under the cap.
    """
    if rows <= sub:
        return rows if rows * row_bytes <= block_cap else None
    cap = (block_cap // row_bytes // sub) * sub
    if cap < sub:
        return None
    half = -(-((rows + 1) // 2) // sub) * sub  # round_up(ceil(rows/2), sub)
    return min(cap, half, rows)


def _tiled_copy_2d(arr2d, tile_rows, vmem_limit):
    """Identity-copy a 2-D array with auto-pipelined full-width blocks."""
    rows, lane = arr2d.shape
    itemsize = jnp.dtype(arr2d.dtype).itemsize
    grid = (pl.cdiv(rows, tile_rows),)
    return pl.pallas_call(
        _copy_kernel,
        out_shape=jax.ShapeDtypeStruct((rows, lane), arr2d.dtype),
        grid=grid,
        in_specs=[pl.BlockSpec((tile_rows, lane), lambda i: (i, 0))],
        out_specs=pl.BlockSpec((tile_rows, lane), lambda i: (i, 0)),
        # Output reuses the input HBM buffer: copy is purely HBM-BW bound.
        input_output_aliases={0: 0},
        compiler_params=pltpu.CompilerParams(
            dimension_semantics=("parallel",),
            vmem_limit_bytes=vmem_limit,
        ),
        cost_estimate=pl.CostEstimate(
            flops=0,
            transcendentals=0,
            bytes_accessed=2 * rows * lane * itemsize,
        ),
    )(arr2d)


def pallas_view(x, *out_shape):
    """Equivalent of `x.view(*out_shape)` with the copy done in a Pallas kernel."""
    numel = x.size
    target = _resolve_shape(numel, out_shape)
    if numel == 0:
        return x.reshape(target)  # nothing to copy; avoid an empty grid

    vmem_limit, block_cap = _vmem_budget()
    itemsize = jnp.dtype(x.dtype).itemsize

    # Work in 32-bit words when the byte stream allows it (identity copy is
    # dtype-agnostic): more shapes become 128-divisible and bf16/int8 sublane
    # packing constraints disappear.
    pack = itemsize < 4 and (numel * itemsize) % 4 == 0
    w_item = 4 if pack else itemsize
    w_count = (numel * itemsize) // w_item

    # ---- Fast path: lane-dense flat 2-D copy over the word stream. --------
    if w_count % 128 == 0:
        lane = next(l for l in _LANE_CANDIDATES if w_count % l == 0)
        rows = w_count // lane
        w_dtype = jnp.dtype(jnp.uint32) if pack else jnp.dtype(x.dtype)
        tile_rows = _pick_tile_rows(rows, lane * w_item,
                                    _sublane_min(w_dtype), block_cap)
        if tile_rows is not None:
            if pack:
                work = jax.lax.bitcast_convert_type(
                    x.reshape(-1, 4 // itemsize), jnp.uint32)
            else:
                work = x.reshape(-1)
            out = _tiled_copy_2d(work.reshape(rows, lane), tile_rows, vmem_limit)
            out = out.reshape(-1)
            if pack:
                out = jax.lax.bitcast_convert_type(out, x.dtype)
            return out.reshape(target)

    # ---- Non-128-divisible streams: tile the collapsed original shape. ----
    # Block = (tile_lead, last_dim); the last block dim equals the full array
    # dim so no 128-divisibility is required, and the ragged edge block along
    # the leading dim is masked by Pallas.  No padding, no extra HBM passes.
    last = x.shape[-1] if x.ndim >= 1 else 1
    lead = numel // last
    tile_lead = _pick_tile_rows(lead, last * itemsize,
                                _sublane_min(x.dtype), block_cap)
    if tile_lead is not None:
        out2d = _tiled_copy_2d(x.reshape(lead, last), tile_lead, vmem_limit)
        return out2d.reshape(target)

    # ---- Last resort (pathological: huge stream whose own last dim does not
    # fit one block and whose word count is not 128-divisible).  Pad the flat
    # stream to a multiple of 128 and slice after; costs extra HBM passes but
    # essentially never triggers for real shapes.
    # TODO(synk): handle this tail in-kernel via manual DMA instead of padding.
    if pack:
        work = jax.lax.bitcast_convert_type(x.reshape(-1, 4 // itemsize),
                                            jnp.uint32)
    else:
        work = x.reshape(-1)
    sub_w = _sublane_min(work.dtype)
    padded = jnp.pad(work, (0, (-w_count) % 128))
    lane = 128
    rows = padded.size // lane
    tile_rows = _pick_tile_rows(rows, lane * w_item, sub_w, block_cap)
    if tile_rows is None:  # unreachable safety net (row_bytes <= 512 B)
        tile_rows = rows if rows <= sub_w else sub_w
    out = _tiled_copy_2d(padded.reshape(rows, lane), tile_rows, vmem_limit)
    out = out.reshape(-1)[:w_count]
    if pack:
        out = jax.lax.bitcast_convert_type(out, x.dtype)
    return out.reshape(target)


class View:
    """Pallas equivalent of the PyTorch `View` module."""

    def __init__(self, *out_shape):
        self.out_shape = out_shape

    def __call__(self, x):
        return pallas_view(x, *self.out_shape)


if __name__ == "__main__":
    key = jax.random.PRNGKey(0)
    k1, k2, k3, k4, k5 = jax.random.split(key, 5)

    # NCHW-style feature map flattened before a linear layer (typical View use).
    x = jax.random.normal(k1, (2, 4, 16, 16), dtype=jnp.float32)
    y = View(2, 4, -1)(x)
    jax.block_until_ready(y)
    assert y.shape == (2, 4, 256) and y.dtype == x.dtype
    assert bool(jnp.array_equal(y, x.reshape(2, 4, 256)))

    # Non-128-divisible element count -> collapsed (lead, last) path (no pad),
    # ragged edge block, grid of 2.
    x2 = jax.random.normal(k2, (3, 5, 7), dtype=jnp.float32)
    y2 = pallas_view(x2, 5, 21)
    jax.block_until_ready(y2)
    assert bool(jnp.array_equal(y2, x2.reshape(5, 21)))

    # bf16 -> packed-to-uint32 lane-dense path.
    x3 = jax.random.normal(k3, (4, 8, 40), dtype=jnp.bfloat16)
    y3 = pallas_view(x3, -1, 160)
    jax.block_until_ready(y3)
    assert y3.shape == (8, 160)
    assert bool(jnp.array_equal(y3, x3.reshape(-1, 160)))

    # Odd bf16 element count (no 32-bit packing possible) -> collapsed path.
    x4 = jax.random.normal(k4, (3, 5, 7), dtype=jnp.bfloat16)
    y4 = pallas_view(x4, 105)
    jax.block_until_ready(y4)
    assert bool(jnp.array_equal(y4, x4.reshape(105)))

    # Moderate tensor exercising the multi-step tiled path (grid >= 2,
    # generation-aware lane-dense blocks).
    x5 = jax.random.normal(k5, (8, 4, 128, 256), dtype=jnp.float32)
    y5 = pallas_view(x5, 8, -1)
    jax.block_until_ready(y5)
    assert bool(jnp.array_equal(y5, x5.reshape(8, -1)))

    print("KERNEL_OK")
</pallas_src>

<mosaic_0001>
module attributes {stable_mosaic.version = 11 : i64} {
  func.func @_copy_kernel(%arg0: i32, %arg1: memref<1x2048xf32, #tpu.memory_space<vmem>>, %arg2: memref<1x2048xf32, #tpu.memory_space<vmem>>) attributes {dimension_semantics = [#tpu.dimension_semantics<parallel>], iteration_bounds = array<i64: 1>, scalar_prefetch = 0 : i64, scratch_operands = 0 : i64, tpu.core_type = #tpu.core_type<tc>, window_params = [{transform_indices = @transform_0, window_bounds = array<i64: 1, 2048>}, {transform_indices = @transform_1, window_bounds = array<i64: 1, 2048>}]} {
    %c0 = arith.constant 0 : index
    %c0_0 = arith.constant 0 : index
    %0 = vector.load %arg1[%c0, %c0_0] : memref<1x2048xf32, #tpu.memory_space<vmem>>, vector<1x2048xf32>
    %c0_1 = arith.constant 0 : index
    %c0_2 = arith.constant 0 : index
    %1 = vector.load %arg2[%c0_1, %c0_2] : memref<1x2048xf32, #tpu.memory_space<vmem>>, vector<1x2048xf32>
    tpu.vector_store %arg2[%c0_1, %c0_2], %0 {strides = array<i32>} : memref<1x2048xf32, #tpu.memory_space<vmem>>, vector<1x2048xf32>,
    return
  }
  func.func @transform_0(%arg0: i32) -> (i32, i32) {
    %c0_i32 = arith.constant 0 : i32
    %c0_i32_0 = arith.constant 0 : i32
    return %arg0, %c0_i32 : i32, i32
  }
  func.func @transform_1(%arg0: i32) -> (i32, i32) {
    %c0_i32 = arith.constant 0 : i32
    %c0_i32_0 = arith.constant 0 : i32
    return %arg0, %c0_i32 : i32, i32
  }
}

</mosaic_0001>

<llo_original>
// kernel: tpu_custom_call.1
$region0: #{tpu_custom_call.1}
  #allocation0 [shape = 'u32[]', space=smem, size = 0x4, offset = 0x4, fixed_abs, tag = 'smem constant byte address 0x4 - core index']
  #allocation1 [shape = 'u32[72,128]{1,0:T(1,128)}', space=vmem, size = 0x9000, scoped, tag = 'internal scratch']
  %s0 = inlined_call_operand.hbm [shape: f32[1,2048], index: 0, kind: input, shape index: {}, may-alias: {0,1}]
  %s1 = inlined_call_operand.hbm [shape: f32[1,2048], index: 1, kind: output, shape index: {}, may-alias: {0,1}]
  %s2 = sld [smem:[#allocation0]]
  $region18: #{tpu_custom_call.1} parent=0
    _
  %s4 = ssub.s32 1, %s2
  %s5 = scalar_select 0, %s4, %s2
  $region1: #{tpu_custom_call.1} parent=0
    #allocation2 [shape = 'u8[8192]{0}', space=vmem, size = 0x2000, scoped, tag = 'input window, operand 0, single buffered']
    #allocation3 [shape = 's32[1]{0}', space=sflag, size = 0x4, scoped, tag = 'scoped memory for tpu_custom_call.1']
    #allocation4 [shape = 's32[1]{0}', space=sflag, size = 0x4, scoped, tag = 'scoped memory for tpu_custom_call.1']
    #allocation5 [shape = 'u8[8192]{0}', space=vmem, size = 0x2000, scoped, tag = 'output window, operand 0, single buffered']
    %6 = vsyncpa [#allocation3], 0
    %7 = vsyncpa [#allocation4], 0
    // Predicated region
    $region2: #{tpu_custom_call.1} parent=1 // pred_check
      _
    $region3: #{tpu_custom_call.1} parent=1 // pred_check_branch
      %9 = sbr.rel (0) target = $region5
    $region4: #{tpu_custom_call.1} parent=1 // pred_region
      %11 = vsyncadd [#allocation3], 0
      %s13 = sshll.u32 %s0, 4
      %s14 = int_to_ptr.hbm [resolvable:$true] %s13
      %s15 = sshll.u32 [#allocation2], 4
      %s16 = int_to_ptr.vmem [resolvable:$true] %s15
      %18 = dma.hbm_to_vmem [thread:$0]  %s14, 256, %s16, [#allocation3]
    $region5: #{tpu_custom_call.1} parent=1 // pred_fallthru
      _
    // Predicated region
    $region6: #{tpu_custom_call.1} parent=1 // pred_check
      _
    $region7: #{tpu_custom_call.1} parent=1 // pred_check_branch
      %20 = sbr.rel (0) target = $region9
    $region8: #{tpu_custom_call.1} parent=1 // pred_region
      %22 = dma.done [#allocation3], 256
    $region9: #{tpu_custom_call.1} parent=1 // pred_fallthru
      _
    %v23 = vld [vmem:[#allocation2] sm:$0xff]
    %v24 = vld [vmem:[#allocation2 + $0x8] sm:$0xff]
    %25 = vst [vmem:[#allocation5] sm:$0xff] %v23
    %26 = vst [vmem:[#allocation5 + $0x8] sm:$0xff] %v24
    // Predicated region
    $region10: #{tpu_custom_call.1} parent=1 // pred_check
      _
    $region11: #{tpu_custom_call.1} parent=1 // pred_check_branch
      %28 = sbr.rel (0) target = $region13
    $region12: #{tpu_custom_call.1} parent=1 // pred_region
      %30 = vsyncadd [#allocation4], 0
      %s32 = sshll.u32 [#allocation5], 4
      %s33 = int_to_ptr.vmem [resolvable:$true] %s32
      %s34 = sshll.u32 %s1, 4
      %s35 = int_to_ptr.hbm [resolvable:$true] %s34
      %37 = dma.vmem_to_hbm [thread:$0]  %s33, 256, %s35, [#allocation4]
    $region13: #{tpu_custom_call.1} parent=1 // pred_fallthru
      _
    // Predicated region
    $region14: #{tpu_custom_call.1} parent=1 // pred_check
      _
    $region15: #{tpu_custom_call.1} parent=1 // pred_check_branch
      %39 = sbr.rel (0) target = $region17
    $region16: #{tpu_custom_call.1} parent=1 // pred_region
      %41 = dma.done [#allocation4], 256
    $region17: #{tpu_custom_call.1} parent=1 // pred_fallthru
      _
    %42 = vsyncpa [#allocation3], 1
    %43 = vsyncpa [#allocation4], 1

</llo_original>
